<compile_context>
chip_gen: v6e
topology: v6e:2x2x1
jax: 0.10.0
libtpu: 0.0.40
codegen_flags: <defaults>
</compile_context>

<pallas_src>
import functools
import math

import jax
import jax.numpy as jnp
from jax.experimental import pallas as pl
from jax.experimental.pallas import tpu as pltpu


def make_pe_table(d_model, max_len=1000, dtype=jnp.float32):
    """Deterministic sinusoidal table, identical math to the torch __init__."""
    position = jnp.arange(max_len, dtype=jnp.float32)[:, None]            # (max_len, 1)
    div_term = jnp.exp(
        jnp.arange(0, d_model, 2, dtype=jnp.float32) * (-math.log(10000.0) / d_model)
    )                                                                      # (d_model/2,)
    pe = jnp.zeros((max_len, d_model), dtype=jnp.float32)
    pe = pe.at[:, 0::2].set(jnp.sin(position * div_term))
    pe = pe.at[:, 1::2].set(jnp.cos(position * div_term))
    return pe.astype(dtype)


def _i32(v):
    """uint32 constant expressed as a wrapping int32."""
    return jnp.int32(v - (1 << 32) if v >= (1 << 31) else v)


def _mix32(x):
    """lowbias32-style integer mixer on int32 with wrapping arithmetic.

    Logical right shifts are emulated via arithmetic shift + mask so only
    signed-int32 ops (xor / shift / and / mul) are used — all lower cleanly
    on the TPU VPU and in interpret mode.
    """
    x = x ^ ((x >> 16) & jnp.int32(0x0000FFFF))
    x = x * _i32(0x7FEB352D)
    x = x ^ ((x >> 15) & jnp.int32(0x0001FFFF))
    x = x * _i32(0x846CA68B)
    x = x ^ ((x >> 16) & jnp.int32(0x0000FFFF))
    return x


def _pe_kernel(seed_ref, x_ref, pe_ref, o_ref, *, train, p, n_cols, tb, tl):
    # x_ref/o_ref: (tb, tl) lane-dense block of the flattened (B, S*D) array.
    # pe_ref: (1, tl) matching slice of the flattened pe row (broadcast over rows).
    y = x_ref[...] + pe_ref[...]                       # native dtype, no f32 upcast
    if train and p >= 1.0:
        y = jnp.zeros_like(y)                          # torch: dropout(p=1) -> zeros
    elif train and p > 0.0:
        li = pl.program_id(0)                          # lane-tile index (outer)
        bi = pl.program_id(1)                          # batch-row-tile index (inner)
        rows = jax.lax.broadcasted_iota(jnp.int32, (tb, tl), 0) + bi * tb
        cols = jax.lax.broadcasted_iota(jnp.int32, (tb, tl), 1) + li * tl
        gid = rows * jnp.int32(n_cols) + cols          # unique id per element
        h = _mix32(gid ^ (seed_ref[0] * _i32(0x9E3779B9)))
        # top 24 bits -> uniform in [0, 1); keep with probability (1 - p).
        u = ((h >> 8) & jnp.int32(0x00FFFFFF)).astype(jnp.float32) * jnp.float32(
            1.0 / (1 << 24)
        )
        keep = u < jnp.float32(1.0 - p)
        scale = jnp.asarray(1.0 / (1.0 - p), dtype=y.dtype)
        y = jnp.where(keep, y * scale, jnp.zeros_like(y))
    o_ref[...] = y


def _choose_tiles(n_rows, n_cols, itemsize, target_block_bytes=2 << 20):
    """Pick (row tile, lane tile) that is (8,128)-aligned and ~2 MiB per buffer."""
    if n_cols % 128 == 0:
        tl = min(n_cols, 4096)
        while n_cols % tl:
            tl -= 128
    else:
        tl = n_cols                                    # full extent (always legal)
    rows = max(1, target_block_bytes // (tl * itemsize))
    if rows >= n_rows:
        tb = n_rows                                    # full extent
    else:
        tb = min(max(8, (rows // 8) * 8), n_rows)      # multiple of 8
    return tb, tl


def positional_encoding(x, pe, *, train=False, dropout_p=0.5, seed=0):
    """x: (B, S, D); pe: (max_len, D).  Returns dropout(x + pe[:S]), like the torch module."""
    B, S, D = x.shape
    L = S * D
    x2 = x.reshape(B, L)                               # lane-dense flattened view
    pe2 = pe[:S].astype(x.dtype).reshape(1, L)         # pre-cast to x dtype (bf16 path)
    tb, tl = _choose_tiles(B, L, jnp.dtype(x.dtype).itemsize)
    grid = (pl.cdiv(L, tl), pl.cdiv(B, tb))            # lane tiles outer, batch inner
    seed_arr = jnp.asarray([seed], dtype=jnp.int32)    # scalar-prefetch (SMEM)

    kernel = functools.partial(
        _pe_kernel, train=bool(train), p=float(dropout_p), n_cols=L, tb=tb, tl=tl
    )

    grid_spec = pltpu.PrefetchScalarGridSpec(
        num_scalar_prefetch=1,
        grid=grid,
        in_specs=[
            # x: one (tb, tl) block per (batch-tile, lane-tile)
            pl.BlockSpec((tb, tl), lambda li, bi, seed: (bi, li)),
            # pe: indexed by the lane tile only -> stays VMEM-resident across
            # the inner batch sweep.
            pl.BlockSpec((1, tl), lambda li, bi, seed: (0, li)),
        ],
        out_specs=pl.BlockSpec((tb, tl), lambda li, bi, seed: (bi, li)),
    )

    out2 = pl.pallas_call(
        kernel,
        out_shape=jax.ShapeDtypeStruct((B, L), x.dtype),
        grid_spec=grid_spec,
        compiler_params=pltpu.CompilerParams(
            # All steps independent (stateless hash) -> both axes parallel
            # (shards across the two TensorCores on v7x; free elsewhere).
            dimension_semantics=("parallel", "parallel"),
            vmem_limit_bytes=32 * 1024 * 1024,
        ),
        # If x is dead after this op, input_output_aliases={1: 0} would reuse
        # its HBM buffer; omitted here because the caller keeps x alive.
    )(seed_arr, x2, pe2)
    return out2.reshape(B, S, D)


if __name__ == "__main__":
    B, S, D = 2, 8, 32          # batch, seq, d_model (d_model even, as the module requires)
    MAX_LEN = 1000

    key = jax.random.PRNGKey(0)
    x = jax.random.normal(key, (B, S, D), dtype=jnp.float32)
    pe = make_pe_table(D, max_len=MAX_LEN)
    ref = x + pe[:S][None, :, :]

    # Eval mode: dropout is identity -> must match the reference.
    out_eval = jax.block_until_ready(positional_encoding(x, pe, train=False))
    assert out_eval.shape == (B, S, D)
    assert jnp.allclose(out_eval, ref, atol=1e-5, rtol=1e-5)

    # Train mode (p=0.5): every element is either 0 or 2 * (x + pe).
    out_train = jax.block_until_ready(positional_encoding(x, pe, train=True, seed=0))
    assert out_train.shape == (B, S, D)
    dropped = out_train == 0
    kept_ok = jnp.isclose(out_train, 2.0 * ref, atol=1e-5, rtol=1e-5)
    assert bool(jnp.all(dropped | kept_ok))
    frac_kept = 1.0 - float(jnp.mean(dropped.astype(jnp.float32)))
    assert 0.2 < frac_kept < 0.8   # loose sanity bound on the keep rate

    print("KERNEL_OK")
</pallas_src>

<mosaic_0001>
module attributes {stable_mosaic.version = 11 : i64} {
  func.func @_pe_kernel(%arg0: i32, %arg1: i32, %arg2: memref<1xi32, #tpu.memory_space<smem>>, %arg3: memref<2x256xf32, #tpu.memory_space<vmem>>, %arg4: memref<1x256xf32, #tpu.memory_space<vmem>>, %arg5: memref<2x256xf32, #tpu.memory_space<vmem>>) attributes {dimension_semantics = [#tpu.dimension_semantics<parallel>, #tpu.dimension_semantics<parallel>], iteration_bounds = array<i64: 1, 1>, scalar_prefetch = 1 : i64, scratch_operands = 0 : i64, tpu.core_type = #tpu.core_type<tc>, window_params = [{transform_indices = @transform_0, window_bounds = array<i64: 2, 256>}, {transform_indices = @transform_1, window_bounds = array<i64: 1, 256>}, {transform_indices = @transform_2, window_bounds = array<i64: 2, 256>}]} {
    %c0 = arith.constant 0 : index
    %c0_0 = arith.constant 0 : index
    %0 = vector.load %arg3[%c0, %c0_0] : memref<2x256xf32, #tpu.memory_space<vmem>>, vector<2x256xf32>
    %c0_1 = arith.constant 0 : index
    %c0_2 = arith.constant 0 : index
    %1 = vector.load %arg4[%c0_1, %c0_2] : memref<1x256xf32, #tpu.memory_space<vmem>>, vector<1x256xf32>
    %2 = vector.broadcast %1 : vector<1x256xf32> to vector<2x256xf32>
    %3 = arith.addf %0, %2 : vector<2x256xf32>
    %c0_3 = arith.constant 0 : index
    %c0_4 = arith.constant 0 : index
    %4 = vector.load %arg5[%c0_3, %c0_4] : memref<2x256xf32, #tpu.memory_space<vmem>>, vector<2x256xf32>
    tpu.vector_store %arg5[%c0_3, %c0_4], %3 {strides = array<i32>} : memref<2x256xf32, #tpu.memory_space<vmem>>, vector<2x256xf32>,
    return
  }
  func.func @transform_0(%arg0: i32, %arg1: i32, %arg2: memref<1xi32, #tpu.memory_space<smem>>) -> (i32, i32) {
    %c0_i32 = arith.constant 0 : i32
    return %arg1, %arg0 : i32, i32
  }
  func.func @transform_1(%arg0: i32, %arg1: i32, %arg2: memref<1xi32, #tpu.memory_space<smem>>) -> (i32, i32) {
    %c0_i32 = arith.constant 0 : i32
    %c0_i32_0 = arith.constant 0 : i32
    return %c0_i32, %arg0 : i32, i32
  }
  func.func @transform_2(%arg0: i32, %arg1: i32, %arg2: memref<1xi32, #tpu.memory_space<smem>>) -> (i32, i32) {
    %c0_i32 = arith.constant 0 : i32
    return %arg1, %arg0 : i32, i32
  }
}

</mosaic_0001>

<llo_original>
// kernel: tpu_custom_call.1
$region0: #{tpu_custom_call.1}
  #allocation0 [shape = 'u32[]', space=smem, size = 0x4, offset = 0x4, fixed_abs, tag = 'smem constant byte address 0x4 - core index']
  #allocation1 [shape = 'u32[144,128]{1,0:T(1,128)}', space=vmem, size = 0x12000, scoped, tag = 'internal scratch']
  #allocation2 [shape = 's32[1]{0}', space=sflag, size = 0x4, scoped, tag = 'scoped memory for tpu_custom_call.1']
  #allocation3 [shape = 's32[1]{0:T(128)S(6)}', space=smem, size = 0x200, scoped, tag = 'prefetched SMEM operand 0']
  %s0 = inlined_call_operand.<no memory space> [shape: s32[1], index: 0, kind: input, shape index: {}]
  %s1 = inlined_call_operand.hbm [shape: f32[2,256], index: 1, kind: input, shape index: {}]
  %s2 = inlined_call_operand.vmem [shape: f32[1,256], index: 2, kind: input, shape index: {}]
  %s3 = inlined_call_operand.hbm [shape: f32[2,256], index: 3, kind: output, shape index: {}]
  %s4 = sld [smem:[#allocation0]]
  $region22: #{tpu_custom_call.1} parent=0
    _
  %s6 = ssub.s32 1, %s4
  %s7 = scalar_select 0, %s6, %s4
  %8 = sst [smem:[#allocation3]] %s0
  $region1: #{tpu_custom_call.1} parent=0
    #allocation4 [shape = 'u8[2048]{0}', space=vmem, size = 0x800, scoped, tag = 'input window, operand 1, single buffered']
    #allocation5 [shape = 's32[1]{0}', space=sflag, size = 0x4, scoped, tag = 'scoped memory for tpu_custom_call.1']
    #allocation6 [shape = 's32[1]{0}', space=sflag, size = 0x4, scoped, tag = 'scoped memory for tpu_custom_call.1']
    #allocation7 [shape = 'u8[2048]{0}', space=vmem, size = 0x800, scoped, tag = 'output window, operand 0, single buffered']
    %9 = vsyncpa [#allocation5], 0
    %10 = vsyncpa [#allocation6], 0
    // Predicated region
    $region2: #{tpu_custom_call.1} parent=1 // pred_check
      _
    $region3: #{tpu_custom_call.1} parent=1 // pred_check_branch
      %12 = sbr.rel (0) target = $region5
    $region4: #{tpu_custom_call.1} parent=1 // pred_region
      %s14 = ssub.s32 64, 64
      %15 = vsyncadd [#allocation5], %s14
      %s17 = sshll.u32 [#allocation4], 4
      %s18 = int_to_ptr.vmem [resolvable:$true] %s17
      %20 = dma.hbm_to_vmem [thread:$0]  %s1, 64, %s18, [#allocation5]
    $region5: #{tpu_custom_call.1} parent=1 // pred_fallthru
      _
    // Predicated region
    $region6: #{tpu_custom_call.1} parent=1 // pred_check
      _
    $region7: #{tpu_custom_call.1} parent=1 // pred_check_branch
      %22 = sbr.rel (0) target = $region9
    $region8: #{tpu_custom_call.1} parent=1 // pred_region
      _
    $region9: #{tpu_custom_call.1} parent=1 // pred_fallthru
      _
    // Predicated region
    $region10: #{tpu_custom_call.1} parent=1 // pred_check
      _
    $region11: #{tpu_custom_call.1} parent=1 // pred_check_branch
      %24 = sbr.rel (0) target = $region13
    $region12: #{tpu_custom_call.1} parent=1 // pred_region
      %25 = dma.done [#allocation5], 64
    $region13: #{tpu_custom_call.1} parent=1 // pred_fallthru
      _
    %v26 = vld [vmem:[#allocation4] sm:$0xf]
    %v27 = vld [vmem:[%s2] sm:$0x3]
    %v29 = vlaneseq
    %v30 = vshrl.u32 %v29, 7
    %v31 = vsub.s32 0, %v30
    %v32 = vrot.slane %v27, %v31
    %v33 = vlaneseq
    %v34 = vshrl.u32 %v33, 7
    %v35 = vsub.s32 1, %v34
    %v36 = vrot.slane %v27, %v35
    %v37 = vcombine.low %v32, %v36
    %v39 = vunpack.c.l.s4 1983009808
    %v40 = vunpack.c.0.s8 %v39
    %v41 = vlaneseq
    %v42 = vshrl.u32 %v41, 7
    %v43 = vsub.s32 %v40, %v42
    %v44 = vrot.slane %v37, %v43
    %v46 = vadd.f32 %v26, %v44
    %47 = vst [vmem:[#allocation7] sm:$0xf] %v46
    // Predicated region
    $region14: #{tpu_custom_call.1} parent=1 // pred_check
      _
    $region15: #{tpu_custom_call.1} parent=1 // pred_check_branch
      %49 = sbr.rel (0) target = $region17
    $region16: #{tpu_custom_call.1} parent=1 // pred_region
      %s51 = ssub.s32 64, 64
      %52 = vsyncadd [#allocation6], %s51
      %s54 = sshll.u32 [#allocation7], 4
      %s55 = int_to_ptr.vmem [resolvable:$true] %s54
      %57 = dma.vmem_to_hbm [thread:$0]  %s55, 64, %s3, [#allocation6]
    $region17: #{tpu_custom_call.1} parent=1 // pred_fallthru
      _
    // Predicated region
    $region18: #{tpu_custom_call.1} parent=1 // pred_check
      _
    $region19: #{tpu_custom_call.1} parent=1 // pred_check_branch
      %59 = sbr.rel (0) target = $region21
    $region20: #{tpu_custom_call.1} parent=1 // pred_region
      %60 = dma.done [#allocation6], 64
    $region21: #{tpu_custom_call.1} parent=1 // pred_fallthru
      _
    %61 = vsyncpa [#allocation5], 1
    %62 = vsyncpa [#allocation6], 1

</llo_original>
